<compile_context>
chip_gen: v6e
topology: v6e:2x2x1
jax: 0.10.0
libtpu: 0.0.40
codegen_flags: <defaults>
</compile_context>

<pallas_src>
import functools

import jax
import jax.numpy as jnp
from jax.experimental import pallas as pl
from jax.experimental.pallas import tpu as pltpu

LANES = 128
SUBLANES = 8
TILE = SUBLANES * LANES  # 1024 elements


def _rmse_block_kernel(pred_ref, target_ref, psum_ref, pcnt_ref, *,
                       rb, rows, need_row_mask):
    """One grid step: masked partial sum of squared error + valid count.

    pred_ref / target_ref : VMEM tiles [rb, 128] (input dtype, upcast here)
    psum_ref / pcnt_ref   : VMEM per-block partials [1, 8, 128] f32
    """
    p = pred_ref[...].astype(jnp.float32)
    t = target_ref[...].astype(jnp.float32)

    valid = t > 0.0
    if need_row_mask:
        # Last block overruns the true row count: mask out-of-range rows so
        # whatever garbage the padded DMA brought in is excluded.
        i = pl.program_id(0)
        row_ids = jax.lax.broadcasted_iota(jnp.int32, (rb, LANES), 0) + i * rb
        valid = jnp.logical_and(valid, row_ids < rows)

    diff = p - t
    sq = jnp.where(valid, diff * diff, jnp.float32(0.0))
    cnt = valid.astype(jnp.float32)

    # Fold (rb, 128) -> (8, 128) with vector adds only (no cross-lane reduce,
    # no scalar accumulation in the hot loop).
    psum_ref[...] = sq.reshape(rb // SUBLANES, SUBLANES, LANES).sum(axis=0)[None]
    pcnt_ref[...] = cnt.reshape(rb // SUBLANES, SUBLANES, LANES).sum(axis=0)[None]


@functools.partial(jax.jit, static_argnames=("row_block",))
def _rmse_device(pred, target, row_block=1024):
    assert row_block % SUBLANES == 0, "row_block must be a multiple of 8"

    # Keep floating inputs in their native dtype (bf16 stays bf16 -> halves
    # HBM read traffic); upcast to f32 in-register inside the kernel.
    cdt = jnp.promote_types(pred.dtype, target.dtype)
    if not jnp.issubdtype(cdt, jnp.floating):
        cdt = jnp.float32
    pred_f = pred.reshape(-1).astype(cdt)
    target_f = target.reshape(-1).astype(cdt)

    total = pred_f.shape[0]
    rem = total % TILE
    if rem:
        # Rare path: pad so rows is a multiple of 8. Padded target == 0 is
        # treated as an invalid pixel, so the metric is unaffected.
        pad = TILE - rem
        pred_f = jnp.pad(pred_f, (0, pad))
        target_f = jnp.pad(target_f, (0, pad))
        total = total + pad

    rows = total // LANES                     # multiple of SUBLANES
    rb = row_block if rows > row_block else rows
    num_blocks = pl.cdiv(rows, rb)
    need_row_mask = (rows % rb) != 0

    pred2d = pred_f.reshape(rows, LANES)
    target2d = target_f.reshape(rows, LANES)

    kernel = functools.partial(
        _rmse_block_kernel, rb=rb, rows=rows, need_row_mask=need_row_mask)

    psum, pcnt = pl.pallas_call(
        kernel,
        out_shape=(
            jax.ShapeDtypeStruct((num_blocks, SUBLANES, LANES), jnp.float32),
            jax.ShapeDtypeStruct((num_blocks, SUBLANES, LANES), jnp.float32),
        ),
        grid_spec=pltpu.PrefetchScalarGridSpec(
            num_scalar_prefetch=0,
            grid=(num_blocks,),
            in_specs=[
                pl.BlockSpec((rb, LANES), lambda i: (i, 0)),
                pl.BlockSpec((rb, LANES), lambda i: (i, 0)),
            ],
            out_specs=(
                pl.BlockSpec((1, SUBLANES, LANES), lambda i: (i, 0, 0)),
                pl.BlockSpec((1, SUBLANES, LANES), lambda i: (i, 0, 0)),
            ),
        ),
        compiler_params=pltpu.CompilerParams(
            dimension_semantics=("parallel",)),
    )(pred2d, target2d)

    s = jnp.sum(psum)
    c = jnp.sum(pcnt)
    mean = s / jnp.maximum(c, jnp.float32(1.0))
    rmse = jnp.sqrt(mean)
    # num_pixels < 10 -> -1
    return jnp.where(c < jnp.float32(10.0), jnp.float32(-1.0), rmse)


def rmse(pred, target):
    """Mirrors RMSE.forward: returns a Python float (or -1.0)."""
    # TODO(synk): the PyTorch module's `.item()` / early-return happens on the
    # host; here the <10-pixels branch is folded into a jnp.where on-device.
    return float(_rmse_device(pred, target))


def _reference(pred, target):
    # Pure-JAX reference matching the PyTorch semantics.
    valid = target > 0
    n = jnp.sum(valid)
    sq = jnp.where(valid, (pred - target) ** 2, 0.0)
    mean = jnp.sum(sq) / jnp.maximum(n, 1)
    return float(jnp.where(n < 10, -1.0, jnp.sqrt(mean)))


if __name__ == "__main__":
    key = jax.random.PRNGKey(0)
    k1, k2, k3 = jax.random.split(key, 3)

    # Depth maps are single-channel NCHW.
    B, C, H, W = 2, 1, 16, 16
    pred = jax.random.uniform(k1, (B, C, H, W), jnp.float32, 0.1, 10.0)
    target = jax.random.uniform(k2, (B, C, H, W), jnp.float32, 0.1, 10.0)
    # Knock out ~30% of target pixels to exercise the validity mask.
    mask = jax.random.uniform(k3, (B, C, H, W)) > 0.3
    target = jnp.where(mask, target, 0.0)

    out = jax.block_until_ready(_rmse_device(pred, target))
    ref = _reference(pred, target)
    assert abs(float(out) - ref) <= 1e-5 + 1e-4 * abs(ref), (float(out), ref)

    # Multi-block grid + masked last block (rows=48, rb=32 -> grid=2, mask on).
    k4, k5, k6 = jax.random.split(jax.random.PRNGKey(1), 3)
    pred2 = jax.random.uniform(k4, (2, 1, 48, 64), jnp.float32, 0.1, 10.0)
    target2 = jax.random.uniform(k5, (2, 1, 48, 64), jnp.float32, 0.1, 10.0)
    mask2 = jax.random.uniform(k6, (2, 1, 48, 64)) > 0.3
    target2 = jnp.where(mask2, target2, 0.0)
    out2 = jax.block_until_ready(_rmse_device(pred2, target2, row_block=32))
    ref2 = _reference(pred2, target2)
    assert abs(float(out2) - ref2) <= 1e-5 + 1e-4 * abs(ref2), (float(out2), ref2)

    # "< 10 valid pixels" branch.
    out3 = jax.block_until_ready(_rmse_device(pred, jnp.zeros_like(target)))
    assert float(out3) == -1.0

    print("KERNEL_OK")
</pallas_src>

<mosaic_0001>
module attributes {stable_mosaic.version = 11 : i64} {
  func.func @_rmse_block_kernel(%arg0: i32, %arg1: memref<8x128xf32, #tpu.memory_space<vmem>>, %arg2: memref<8x128xf32, #tpu.memory_space<vmem>>, %arg3: memref<1x8x128xf32, #tpu.memory_space<vmem>>, %arg4: memref<1x8x128xf32, #tpu.memory_space<vmem>>) attributes {dimension_semantics = [#tpu.dimension_semantics<parallel>], iteration_bounds = array<i64: 1>, scalar_prefetch = 0 : i64, scratch_operands = 0 : i64, tpu.core_type = #tpu.core_type<tc>, window_params = [{transform_indices = @transform_0, window_bounds = array<i64: 8, 128>}, {transform_indices = @transform_1, window_bounds = array<i64: 8, 128>}, {transform_indices = @transform_2, window_bounds = array<i64: 1, 8, 128>}, {transform_indices = @transform_3, window_bounds = array<i64: 1, 8, 128>}]} {
    %c0 = arith.constant 0 : index
    %c0_0 = arith.constant 0 : index
    %0 = vector.load %arg1[%c0, %c0_0] : memref<8x128xf32, #tpu.memory_space<vmem>>, vector<8x128xf32>
    %c0_1 = arith.constant 0 : index
    %c0_2 = arith.constant 0 : index
    %1 = vector.load %arg2[%c0_1, %c0_2] : memref<8x128xf32, #tpu.memory_space<vmem>>, vector<8x128xf32>
    %cst = arith.constant 0.000000e+00 : f32
    %2 = vector.broadcast %cst : f32 to vector<8x128xf32>
    %3 = arith.cmpf ogt, %1, %2 : vector<8x128xf32>
    %4 = arith.subf %0, %1 : vector<8x128xf32>
    %5 = arith.mulf %4, %4 : vector<8x128xf32>
    %cst_3 = arith.constant 0.000000e+00 : f32
    %6 = vector.broadcast %cst_3 : f32 to vector<8x128xf32>
    %7 = arith.select %3, %5, %6 : vector<8x128xi1>, vector<8x128xf32>
    %8 = arith.extui %3 : vector<8x128xi1> to vector<8x128xi32>
    %9 = arith.sitofp %8 : vector<8x128xi32> to vector<8x128xf32>
    %10 = vector.shape_cast %7 : vector<8x128xf32> to vector<1x8x128xf32>
    %cst_4 = arith.constant dense<0.000000e+00> : vector<8x128xf32>
    %11 = vector.multi_reduction <add>, %10, %cst_4 [0] : vector<1x8x128xf32> to vector<8x128xf32>
    %12 = vector.shape_cast %11 : vector<8x128xf32> to vector<1x8x128xf32>
    %c0_5 = arith.constant 0 : index
    %c0_6 = arith.constant 0 : index
    %c0_7 = arith.constant 0 : index
    %13 = vector.load %arg3[%c0_5, %c0_6, %c0_7] : memref<1x8x128xf32, #tpu.memory_space<vmem>>, vector<1x8x128xf32>
    tpu.vector_store %arg3[%c0_5, %c0_6, %c0_7], %12 {strides = array<i32>} : memref<1x8x128xf32, #tpu.memory_space<vmem>>, vector<1x8x128xf32>,
    %14 = vector.shape_cast %9 : vector<8x128xf32> to vector<1x8x128xf32>
    %cst_8 = arith.constant dense<0.000000e+00> : vector<8x128xf32>
    %15 = vector.multi_reduction <add>, %14, %cst_8 [0] : vector<1x8x128xf32> to vector<8x128xf32>
    %16 = vector.shape_cast %15 : vector<8x128xf32> to vector<1x8x128xf32>
    %c0_9 = arith.constant 0 : index
    %c0_10 = arith.constant 0 : index
    %c0_11 = arith.constant 0 : index
    %17 = vector.load %arg4[%c0_9, %c0_10, %c0_11] : memref<1x8x128xf32, #tpu.memory_space<vmem>>, vector<1x8x128xf32>
    tpu.vector_store %arg4[%c0_9, %c0_10, %c0_11], %16 {strides = array<i32>} : memref<1x8x128xf32, #tpu.memory_space<vmem>>, vector<1x8x128xf32>,
    return
  }
  func.func @transform_0(%arg0: i32) -> (i32, i32) {
    %c0_i32 = arith.constant 0 : i32
    %c0_i32_0 = arith.constant 0 : i32
    return %arg0, %c0_i32 : i32, i32
  }
  func.func @transform_1(%arg0: i32) -> (i32, i32) {
    %c0_i32 = arith.constant 0 : i32
    %c0_i32_0 = arith.constant 0 : i32
    return %arg0, %c0_i32 : i32, i32
  }
  func.func @transform_2(%arg0: i32) -> (i32, i32, i32) {
    %c0_i32 = arith.constant 0 : i32
    %c0_i32_0 = arith.constant 0 : i32
    %c0_i32_1 = arith.constant 0 : i32
    return %arg0, %c0_i32, %c0_i32_0 : i32, i32, i32
  }
  func.func @transform_3(%arg0: i32) -> (i32, i32, i32) {
    %c0_i32 = arith.constant 0 : i32
    %c0_i32_0 = arith.constant 0 : i32
    %c0_i32_1 = arith.constant 0 : i32
    return %arg0, %c0_i32, %c0_i32_0 : i32, i32, i32
  }
}

</mosaic_0001>

<llo_original>
// kernel: _rmse_device.1
$region0: #{_rmse_device.1}
  #allocation0 [shape = 'u32[]', space=smem, size = 0x4, offset = 0x4, fixed_abs, tag = 'smem constant byte address 0x4 - core index']
  #allocation1 [shape = 'u32[144,128]{1,0:T(1,128)}', space=vmem, size = 0x12000, scoped, tag = 'internal scratch']
  %s0 = inlined_call_operand.vmem [shape: f32[8,128], index: 0, kind: input, shape index: {}]
  %s1 = inlined_call_operand.vmem [shape: f32[8,128], index: 1, kind: input, shape index: {}]
  %s2 = inlined_call_operand.vmem [shape: f32[1,8,128], index: 2, kind: output, shape index: {0}]
  %s3 = inlined_call_operand.vmem [shape: f32[1,8,128], index: 3, kind: output, shape index: {1}]
  %4 = xla_tuple %s2, %s3
  %s5 = sld [smem:[#allocation0]]
  $region26: #{_rmse_device.1} parent=0
    _
  %s7 = ssub.s32 1, %s5
  %s8 = scalar_select 0, %s7, %s5
  // Predicated region
  $region2: #{_rmse_device.1} parent=0 // pred_check
    _
  $region3: #{_rmse_device.1} parent=0 // pred_check_branch
    %10 = sbr.rel (0) target = $region5
  $region4: #{_rmse_device.1} parent=0 // pred_region
    _
  $region5: #{_rmse_device.1} parent=0 // pred_fallthru
    _
  // Predicated region
  $region6: #{_rmse_device.1} parent=0 // pred_check
    _
  $region7: #{_rmse_device.1} parent=0 // pred_check_branch
    %12 = sbr.rel (0) target = $region9
  $region8: #{_rmse_device.1} parent=0 // pred_region
    _
  $region9: #{_rmse_device.1} parent=0 // pred_fallthru
    _
  %v13 = vld [vmem:[%s0] sm:$0xff]
  %v14 = vld [vmem:[%s1] sm:$0xff]
  %vm15 = vcmp.gt.f32.partialorder %v14, 0.0
  %v16 = vsub.f32 %v13, %v14
  %v17 = vmul.f32 %v16, %v16
  %v18 = vsel %vm15, %v17, 0.0
  %v19 = vsel %vm15, 1, 0
  %v20 = vcvt.s32.f32 %v19
  %v21 = vadd.f32 %v18, 0.0
  %22 = vst [vmem:[%s2] sm:$0xff] %v21
  %v23 = vadd.f32 %v20, 0.0
  %24 = vst [vmem:[%s3] sm:$0xff] %v23
  // Predicated region
  $region10: #{_rmse_device.1} parent=0 // pred_check
    _
  $region11: #{_rmse_device.1} parent=0 // pred_check_branch
    %26 = sbr.rel (0) target = $region13
  $region12: #{_rmse_device.1} parent=0 // pred_region
    _
  $region13: #{_rmse_device.1} parent=0 // pred_fallthru
    _
  // Predicated region
  $region14: #{_rmse_device.1} parent=0 // pred_check
    _
  $region15: #{_rmse_device.1} parent=0 // pred_check_branch
    %28 = sbr.rel (0) target = $region17
  $region16: #{_rmse_device.1} parent=0 // pred_region
    _
  $region17: #{_rmse_device.1} parent=0 // pred_fallthru
    _
  // Predicated region
  $region18: #{_rmse_device.1} parent=0 // pred_check
    _
  $region19: #{_rmse_device.1} parent=0 // pred_check_branch
    %30 = sbr.rel (0) target = $region21
  $region20: #{_rmse_device.1} parent=0 // pred_region
    _
  $region21: #{_rmse_device.1} parent=0 // pred_fallthru
    _
  // Predicated region
  $region22: #{_rmse_device.1} parent=0 // pred_check
    _
  $region23: #{_rmse_device.1} parent=0 // pred_check_branch
    %32 = sbr.rel (0) target = $region25
  $region24: #{_rmse_device.1} parent=0 // pred_region
    _
  $region25: #{_rmse_device.1} parent=0 // pred_fallthru
    _

</llo_original>
